<compile_context>
chip_gen: v6e
topology: v6e:2x2x1
jax: 0.10.0
libtpu: 0.0.40
codegen_flags: <defaults>
</compile_context>

<pallas_src>
import jax
import jax.numpy as jnp
from jax.experimental import pallas as pl
from jax.experimental.pallas import tpu as pltpu


# ----------------------------------------------------------------------------
# Pallas kernel: assemble the 2x2 mosaic with 4 strided HBM->HBM DMAs.
# All refs live in HBM (memory_space=pl.ANY); nothing is staged through VMEM.
# ----------------------------------------------------------------------------
def _mosaic_dma_kernel(img0_ref, img1_ref, img2_ref, img3_ref, out_ref, sem):
    C, H, W = img0_ref.shape
    copies = []
    for q, img_ref in enumerate((img0_ref, img1_ref, img2_ref, img3_ref)):
        r, c = divmod(q, 2)  # quadrant row / col (static Python ints)
        dst = out_ref.at[:, pl.ds(r * H, H), pl.ds(c * W, W)]
        cp = pltpu.make_async_copy(img_ref, dst, sem.at[q])
        cp.start()
        copies.append(cp)
    # All 4 DMAs are in flight concurrently; now drain them.
    for cp in copies:
        cp.wait()


# ----------------------------------------------------------------------------
# Wrapper class (mirrors MosaicBatchTransforms' validation + concrete forward)
# ----------------------------------------------------------------------------
class MosaicBatchTransformsPallas:
    def __init__(self, min_size: int = 1, disable_warnings: bool = True) -> None:
        self.min_size = min_size
        self.disable_warnings = disable_warnings

    # --- Python-level validation (host-side; no Pallas equivalent) ----------
    def validate_forward_inputs(self, images, targets) -> None:
        if len(images) != len(targets):
            raise ValueError(
                f"Unequal number of images and targets: {len(images)} and {len(targets)}."
            )
        if len(images) < self.min_size:
            raise ValueError(
                f"Batch size must be at least of the size 4. Given: {len(images)}."
            )
        if not all(isinstance(image, jax.Array) for image in images):
            raise ValueError(
                f"All images must be arrays. Found: {set(type(i) for i in images)}."
            )
        if not all("boxes" in target for target in targets):
            raise ValueError('All targets must have a "boxes" key.')
        if not all(isinstance(target["boxes"], jax.Array) for target in targets):
            raise ValueError(
                "All bounding boxes must be arrays. "
                f"Found: {set(type(t['boxes']) for t in targets)}."
            )
        if not self.disable_warnings and len(images) % self.min_size != 0:
            print(f"Warning: batch size should be divisible by {self.min_size} for Mosaic.")

    # --- Pallas mosaic assembly (HBM->HBM strided DMAs) ----------------------
    def _assemble_mosaic(self, img0, img1, img2, img3):
        C, H, W = img0.shape
        dtype = img0.dtype
        itemsize = jnp.dtype(dtype).itemsize
        return pl.pallas_call(
            _mosaic_dma_kernel,
            out_shape=jax.ShapeDtypeStruct((C, 2 * H, 2 * W), dtype),
            in_specs=[pl.BlockSpec(memory_space=pl.ANY)] * 4,
            out_specs=pl.BlockSpec(memory_space=pl.ANY),
            scratch_shapes=[pltpu.SemaphoreType.DMA((4,))],
            cost_estimate=pl.CostEstimate(
                flops=0,
                transcendentals=0,
                bytes_accessed=2 * 4 * C * H * W * itemsize,  # read 4 imgs + write mosaic
            ),
        )(img0, img1, img2, img3)

    # --- concrete Mosaic forward ---------------------------------------------
    def forward(self, images, targets):
        self.validate_forward_inputs(images, targets)
        if len(images) < 4:
            raise ValueError(
                f"Mosaic assembly needs at least 4 images; got {len(images)}."
            )
        if not self.disable_warnings and len(images) > 4:
            print("Warning: only the first 4 images are used for the mosaic.")

        imgs = [jnp.asarray(im) for im in images[:4]]
        if len({im.shape for im in imgs}) != 1 or len({str(im.dtype) for im in imgs}) != 1:
            raise ValueError(
                "All 4 mosaic images must share shape and dtype. "
                f"Got shapes {[im.shape for im in imgs]} and dtypes {[im.dtype for im in imgs]}."
            )
        C, H, W = imgs[0].shape

        # Native-dtype mosaic assembly: four concurrent HBM->HBM DMAs.
        mosaic = self._assemble_mosaic(*imgs)

        # Box shift: plain JAX (fused by XLA); a 4-lane-wide Pallas kernel
        # would waste ~97% of every vreg and cost more in launch overhead.
        out_targets = []
        for q, t in enumerate(targets[:4]):
            r, c = divmod(q, 2)
            boxes = jnp.asarray(t["boxes"])
            offset = jnp.asarray([c * W, r * H, c * W, r * H], dtype=boxes.dtype)
            new_t = dict(t)
            new_t["boxes"] = boxes + offset
            out_targets.append(new_t)

        return (mosaic,), tuple(out_targets)

    __call__ = forward


# ----------------------------------------------------------------------------
# Demo / smoke test
# ----------------------------------------------------------------------------
if __name__ == "__main__":
    key = jax.random.PRNGKey(0)
    # Small, DMA-friendly shapes: W multiple of 128, H multiple of 32 (covers
    # f32 tile-aligned and uint8 tile-aligned quadrant offsets).
    B, C, H, W, M = 4, 3, 32, 128, 5

    k_img, k_box = jax.random.split(key)

    # ---- float32 run --------------------------------------------------------
    imgs_all = jax.random.uniform(k_img, (B, C, H, W), jnp.float32)
    boxes_all = jax.random.uniform(k_box, (B, M, 4), jnp.float32) * float(H - 1)

    images = tuple(imgs_all[i] for i in range(B))
    targets = tuple(
        {"boxes": boxes_all[i], "labels": jnp.arange(M, dtype=jnp.int32)}
        for i in range(B)
    )

    transform = MosaicBatchTransformsPallas(min_size=1, disable_warnings=True)
    (mosaic_img,), out_targets = transform(images, targets)
    jax.block_until_ready(mosaic_img)
    jax.block_until_ready(out_targets[0]["boxes"])

    ref = jnp.zeros((C, 2 * H, 2 * W), jnp.float32)
    ref = ref.at[:, :H, :W].set(images[0])
    ref = ref.at[:, :H, W:].set(images[1])
    ref = ref.at[:, H:, :W].set(images[2])
    ref = ref.at[:, H:, W:].set(images[3])
    assert mosaic_img.dtype == jnp.float32, "dtype must be preserved"
    assert jnp.array_equal(mosaic_img, ref), "mosaic image mismatch (f32)"

    ref_b1 = targets[1]["boxes"] + jnp.asarray([W, 0, W, 0], jnp.float32)
    ref_b2 = targets[2]["boxes"] + jnp.asarray([0, H, 0, H], jnp.float32)
    ref_b3 = targets[3]["boxes"] + jnp.asarray([W, H, W, H], jnp.float32)
    assert jnp.array_equal(out_targets[0]["boxes"], targets[0]["boxes"]), "box shift mismatch (q0)"
    assert jnp.allclose(out_targets[1]["boxes"], ref_b1), "box shift mismatch (q1)"
    assert jnp.allclose(out_targets[2]["boxes"], ref_b2), "box shift mismatch (q2)"
    assert jnp.allclose(out_targets[3]["boxes"], ref_b3), "box shift mismatch (q3)"

    # ---- uint8 run (native narrow dtype: 4x fewer bytes than f32) -----------
    imgs_u8 = jax.random.randint(k_img, (B, C, H, W), 0, 256, jnp.int32).astype(jnp.uint8)
    images_u8 = tuple(imgs_u8[i] for i in range(B))
    (mosaic_u8,), _ = transform(images_u8, targets)
    jax.block_until_ready(mosaic_u8)

    assert mosaic_u8.dtype == jnp.uint8, "dtype must be preserved (no f32 upcast)"
    ref_u8 = jnp.zeros((C, 2 * H, 2 * W), jnp.uint8)
    ref_u8 = ref_u8.at[:, :H, :W].set(images_u8[0])
    ref_u8 = ref_u8.at[:, :H, W:].set(images_u8[1])
    ref_u8 = ref_u8.at[:, H:, :W].set(images_u8[2])
    ref_u8 = ref_u8.at[:, H:, W:].set(images_u8[3])
    assert jnp.array_equal(mosaic_u8, ref_u8), "mosaic image mismatch (uint8)"

    print("KERNEL_OK")
</pallas_src>

<mosaic_0001>
module attributes {stable_mosaic.version = 11 : i64} {
  func.func @_mosaic_dma_kernel(%arg0: memref<3x32x128xf32, #tpu.memory_space<any>>, %arg1: memref<3x32x128xf32, #tpu.memory_space<any>>, %arg2: memref<3x32x128xf32, #tpu.memory_space<any>>, %arg3: memref<3x32x128xf32, #tpu.memory_space<any>>, %arg4: memref<3x64x256xf32, #tpu.memory_space<any>>, %arg5: memref<4x!tpu.dma_semaphore, #tpu.memory_space<semaphore_mem>>) attributes {dimension_semantics = [], scalar_prefetch = 0 : i64, scratch_operands = 1 : i64, tpu.core_type = #tpu.core_type<tc>} {
    %c0_i32 = arith.constant 0 : i32
    %c0_i32_0 = arith.constant 0 : i32
    %c0_i32_1 = arith.constant 0 : i32
    %c0_i32_2 = arith.constant 0 : i32
    %0 = tpu.memref_slice %arg4[%c0_i32_0, %c0_i32_1, %c0_i32_2] : memref<3x64x256xf32, #tpu.memory_space<any>> -> memref<3x32x128xf32, #tpu.memory_space<any>>
    %1 = tpu.memref_slice %arg5[%c0_i32] : memref<4x!tpu.dma_semaphore, #tpu.memory_space<semaphore_mem>> -> memref<1x!tpu.dma_semaphore, #tpu.memory_space<semaphore_mem>>
    %2 = tpu.memref_squeeze %1 : memref<1x!tpu.dma_semaphore, #tpu.memory_space<semaphore_mem>> -> memref<!tpu.dma_semaphore, #tpu.memory_space<semaphore_mem>>
    tpu.enqueue_dma source(%arg0 : memref<3x32x128xf32, #tpu.memory_space<any>>) target(%0 : memref<3x32x128xf32, #tpu.memory_space<any>>) target_semaphore(%2 : memref<!tpu.dma_semaphore, #tpu.memory_space<semaphore_mem>>)
    %c1_i32 = arith.constant 1 : i32
    %c0_i32_3 = arith.constant 0 : i32
    %c0_i32_4 = arith.constant 0 : i32
    %c128_i32 = arith.constant 128 : i32
    %3 = tpu.memref_slice %arg4[%c0_i32_3, %c0_i32_4, %c128_i32] : memref<3x64x256xf32, #tpu.memory_space<any>> -> memref<3x32x128xf32, #tpu.memory_space<any>>
    %4 = tpu.memref_slice %arg5[%c1_i32] : memref<4x!tpu.dma_semaphore, #tpu.memory_space<semaphore_mem>> -> memref<1x!tpu.dma_semaphore, #tpu.memory_space<semaphore_mem>>
    %5 = tpu.memref_squeeze %4 : memref<1x!tpu.dma_semaphore, #tpu.memory_space<semaphore_mem>> -> memref<!tpu.dma_semaphore, #tpu.memory_space<semaphore_mem>>
    tpu.enqueue_dma source(%arg1 : memref<3x32x128xf32, #tpu.memory_space<any>>) target(%3 : memref<3x32x128xf32, #tpu.memory_space<any>>) target_semaphore(%5 : memref<!tpu.dma_semaphore, #tpu.memory_space<semaphore_mem>>)
    %c2_i32 = arith.constant 2 : i32
    %c0_i32_5 = arith.constant 0 : i32
    %c32_i32 = arith.constant 32 : i32
    %c0_i32_6 = arith.constant 0 : i32
    %6 = tpu.memref_slice %arg4[%c0_i32_5, %c32_i32, %c0_i32_6] : memref<3x64x256xf32, #tpu.memory_space<any>> -> memref<3x32x128xf32, #tpu.memory_space<any>>
    %7 = tpu.memref_slice %arg5[%c2_i32] : memref<4x!tpu.dma_semaphore, #tpu.memory_space<semaphore_mem>> -> memref<1x!tpu.dma_semaphore, #tpu.memory_space<semaphore_mem>>
    %8 = tpu.memref_squeeze %7 : memref<1x!tpu.dma_semaphore, #tpu.memory_space<semaphore_mem>> -> memref<!tpu.dma_semaphore, #tpu.memory_space<semaphore_mem>>
    tpu.enqueue_dma source(%arg2 : memref<3x32x128xf32, #tpu.memory_space<any>>) target(%6 : memref<3x32x128xf32, #tpu.memory_space<any>>) target_semaphore(%8 : memref<!tpu.dma_semaphore, #tpu.memory_space<semaphore_mem>>)
    %c3_i32 = arith.constant 3 : i32
    %c0_i32_7 = arith.constant 0 : i32
    %c32_i32_8 = arith.constant 32 : i32
    %c128_i32_9 = arith.constant 128 : i32
    %9 = tpu.memref_slice %arg4[%c0_i32_7, %c32_i32_8, %c128_i32_9] : memref<3x64x256xf32, #tpu.memory_space<any>> -> memref<3x32x128xf32, #tpu.memory_space<any>>
    %10 = tpu.memref_slice %arg5[%c3_i32] : memref<4x!tpu.dma_semaphore, #tpu.memory_space<semaphore_mem>> -> memref<1x!tpu.dma_semaphore, #tpu.memory_space<semaphore_mem>>
    %11 = tpu.memref_squeeze %10 : memref<1x!tpu.dma_semaphore, #tpu.memory_space<semaphore_mem>> -> memref<!tpu.dma_semaphore, #tpu.memory_space<semaphore_mem>>
    tpu.enqueue_dma source(%arg3 : memref<3x32x128xf32, #tpu.memory_space<any>>) target(%9 : memref<3x32x128xf32, #tpu.memory_space<any>>) target_semaphore(%11 : memref<!tpu.dma_semaphore, #tpu.memory_space<semaphore_mem>>)
    %c0_i32_10 = arith.constant 0 : i32
    %c0_i32_11 = arith.constant 0 : i32
    %c0_i32_12 = arith.constant 0 : i32
    %c0_i32_13 = arith.constant 0 : i32
    %12 = tpu.memref_slice %arg4[%c0_i32_11, %c0_i32_12, %c0_i32_13] : memref<3x64x256xf32, #tpu.memory_space<any>> -> memref<3x32x128xf32, #tpu.memory_space<any>>
    %13 = tpu.memref_slice %arg5[%c0_i32_10] : memref<4x!tpu.dma_semaphore, #tpu.memory_space<semaphore_mem>> -> memref<1x!tpu.dma_semaphore, #tpu.memory_space<semaphore_mem>>
    %14 = tpu.memref_squeeze %13 : memref<1x!tpu.dma_semaphore, #tpu.memory_space<semaphore_mem>> -> memref<!tpu.dma_semaphore, #tpu.memory_space<semaphore_mem>>
    tpu.wait_dma2 semaphore(%14 : memref<!tpu.dma_semaphore, #tpu.memory_space<semaphore_mem>>) src(%arg0 : memref<3x32x128xf32, #tpu.memory_space<any>>) dst(%12 : memref<3x32x128xf32, #tpu.memory_space<any>>)
    %c1_i32_14 = arith.constant 1 : i32
    %c0_i32_15 = arith.constant 0 : i32
    %c0_i32_16 = arith.constant 0 : i32
    %c128_i32_17 = arith.constant 128 : i32
    %15 = tpu.memref_slice %arg4[%c0_i32_15, %c0_i32_16, %c128_i32_17] : memref<3x64x256xf32, #tpu.memory_space<any>> -> memref<3x32x128xf32, #tpu.memory_space<any>>
    %16 = tpu.memref_slice %arg5[%c1_i32_14] : memref<4x!tpu.dma_semaphore, #tpu.memory_space<semaphore_mem>> -> memref<1x!tpu.dma_semaphore, #tpu.memory_space<semaphore_mem>>
    %17 = tpu.memref_squeeze %16 : memref<1x!tpu.dma_semaphore, #tpu.memory_space<semaphore_mem>> -> memref<!tpu.dma_semaphore, #tpu.memory_space<semaphore_mem>>
    tpu.wait_dma2 semaphore(%17 : memref<!tpu.dma_semaphore, #tpu.memory_space<semaphore_mem>>) src(%arg1 : memref<3x32x128xf32, #tpu.memory_space<any>>) dst(%15 : memref<3x32x128xf32, #tpu.memory_space<any>>)
    %c2_i32_18 = arith.constant 2 : i32
    %c0_i32_19 = arith.constant 0 : i32
    %c32_i32_20 = arith.constant 32 : i32
    %c0_i32_21 = arith.constant 0 : i32
    %18 = tpu.memref_slice %arg4[%c0_i32_19, %c32_i32_20, %c0_i32_21] : memref<3x64x256xf32, #tpu.memory_space<any>> -> memref<3x32x128xf32, #tpu.memory_space<any>>
    %19 = tpu.memref_slice %arg5[%c2_i32_18] : memref<4x!tpu.dma_semaphore, #tpu.memory_space<semaphore_mem>> -> memref<1x!tpu.dma_semaphore, #tpu.memory_space<semaphore_mem>>
    %20 = tpu.memref_squeeze %19 : memref<1x!tpu.dma_semaphore, #tpu.memory_space<semaphore_mem>> -> memref<!tpu.dma_semaphore, #tpu.memory_space<semaphore_mem>>
    tpu.wait_dma2 semaphore(%20 : memref<!tpu.dma_semaphore, #tpu.memory_space<semaphore_mem>>) src(%arg2 : memref<3x32x128xf32, #tpu.memory_space<any>>) dst(%18 : memref<3x32x128xf32, #tpu.memory_space<any>>)
    %c3_i32_22 = arith.constant 3 : i32
    %c0_i32_23 = arith.constant 0 : i32
    %c32_i32_24 = arith.constant 32 : i32
    %c128_i32_25 = arith.constant 128 : i32
    %21 = tpu.memref_slice %arg4[%c0_i32_23, %c32_i32_24, %c128_i32_25] : memref<3x64x256xf32, #tpu.memory_space<any>> -> memref<3x32x128xf32, #tpu.memory_space<any>>
    %22 = tpu.memref_slice %arg5[%c3_i32_22] : memref<4x!tpu.dma_semaphore, #tpu.memory_space<semaphore_mem>> -> memref<1x!tpu.dma_semaphore, #tpu.memory_space<semaphore_mem>>
    %23 = tpu.memref_squeeze %22 : memref<1x!tpu.dma_semaphore, #tpu.memory_space<semaphore_mem>> -> memref<!tpu.dma_semaphore, #tpu.memory_space<semaphore_mem>>
    tpu.wait_dma2 semaphore(%23 : memref<!tpu.dma_semaphore, #tpu.memory_space<semaphore_mem>>) src(%arg3 : memref<3x32x128xf32, #tpu.memory_space<any>>) dst(%21 : memref<3x32x128xf32, #tpu.memory_space<any>>)
    return
  }
}

</mosaic_0001>

<llo_original>
// kernel: tpu_custom_call.1
$region0: #{tpu_custom_call.1}
  #allocation0 [shape = 'u32[]', space=smem, size = 0x4, offset = 0x4, fixed_abs, tag = 'smem constant byte address 0x4 - core index']
  #allocation1 [shape = 'u32[144,128]{1,0:T(1,128)}', space=vmem, size = 0x12000, scoped, tag = 'internal scratch']
  #allocation2 [shape = 's32[4]{0}', space=sflag, size = 0x10, scoped, tag = 'scratch operand']
  #allocation3 [shape = 's32[]', space=sflag, size = 0x4, offset = 0, fixed_abs, tag = 'sflag constant byte address 0x0 - dummy sync flag']
  #allocation5 [shape = 's32[]', space=sflag, size = 0x4, offset = 0, fixed_abs, tag = 'sflag constant byte address 0x0 - dummy sync flag']
  #allocation7 [shape = 's32[]', space=sflag, size = 0x4, offset = 0, fixed_abs, tag = 'sflag constant byte address 0x0 - dummy sync flag']
  #allocation9 [shape = 's32[]', space=sflag, size = 0x4, offset = 0, fixed_abs, tag = 'sflag constant byte address 0x0 - dummy sync flag']
  %s0 = inlined_call_operand.hbm [shape: f32[3,32,128], index: 0, kind: input, shape index: {}]
  %s1 = inlined_call_operand.hbm [shape: f32[3,32,128], index: 1, kind: input, shape index: {}]
  %s2 = inlined_call_operand.hbm [shape: f32[3,32,128], index: 2, kind: input, shape index: {}]
  %s3 = inlined_call_operand.hbm [shape: f32[3,32,128], index: 3, kind: input, shape index: {}]
  %s4 = inlined_call_operand.hbm [shape: f32[3,64,256], index: 4, kind: output, shape index: {}]
  %s5 = sld [smem:[#allocation0]]
  $region2: #{tpu_custom_call.1} parent=0
    _
  %s7 = ssub.s32 1, %s5
  %s8 = scalar_select 0, %s7, %s5
  $region1: #{tpu_custom_call.1} parent=0
    #allocation4 [shape = 'u32[6]{0}', space=smem, size = 0x18, scoped, tag = 'DMA stride descriptor']
    #allocation6 [shape = 'u32[6]{0}', space=smem, size = 0x18, scoped, tag = 'DMA stride descriptor']
    #allocation8 [shape = 'u32[6]{0}', space=smem, size = 0x18, scoped, tag = 'DMA stride descriptor']
    #allocation10 [shape = 'u32[6]{0}', space=smem, size = 0x18, scoped, tag = 'DMA stride descriptor']
    %s10 = sshll.u32 1, 14
    %s11 = sxor.u32 4294967295, %s10
    %15 = sst [smem:[#allocation4]] 512
    %s16 = scalar_lea.smem [#allocation4], 1
    %17 = sst [smem:[%s16]] 2048
    %s18 = scalar_lea.smem [#allocation4], 2
    %19 = sst [smem:[%s18]] 4
    %s20 = scalar_lea.smem [#allocation4], 3
    %21 = sst [smem:[%s20]] 128
    %s22 = scalar_lea.smem [#allocation4], 4
    %23 = sst [smem:[%s22]] 256
    %s24 = scalar_lea.smem [#allocation4], 5
    %25 = sst [smem:[%s24]] 8
    %27 = dma.general %s0, 1536, %s4, [#allocation2], 131072, [#allocation4], 0, 0
    %s28 = scalar_lea.hbm %s4, 128
    %s29 = scalar_lea.sflag [#allocation2], 1
    %s31 = sshll.u32 1, 14
    %s32 = sxor.u32 4294967295, %s31
    %36 = sst [smem:[#allocation6]] 512
    %s37 = scalar_lea.smem [#allocation6], 1
    %38 = sst [smem:[%s37]] 2048
    %s39 = scalar_lea.smem [#allocation6], 2
    %40 = sst [smem:[%s39]] 4
    %s41 = scalar_lea.smem [#allocation6], 3
    %42 = sst [smem:[%s41]] 128
    %s43 = scalar_lea.smem [#allocation6], 4
    %44 = sst [smem:[%s43]] 256
    %s45 = scalar_lea.smem [#allocation6], 5
    %46 = sst [smem:[%s45]] 8
    %48 = dma.general %s1, 1536, %s28, %s29, 131072, [#allocation6], 0, 0
    %s49 = scalar_lea.hbm %s4, 1024
    %s50 = scalar_lea.sflag [#allocation2], 2
    %s52 = sshll.u32 1, 14
    %s53 = sxor.u32 4294967295, %s52
    %57 = sst [smem:[#allocation8]] 512
    %s58 = scalar_lea.smem [#allocation8], 1
    %59 = sst [smem:[%s58]] 2048
    %s60 = scalar_lea.smem [#allocation8], 2
    %61 = sst [smem:[%s60]] 4
    %s62 = scalar_lea.smem [#allocation8], 3
    %63 = sst [smem:[%s62]] 128
    %s64 = scalar_lea.smem [#allocation8], 4
    %65 = sst [smem:[%s64]] 256
    %s66 = scalar_lea.smem [#allocation8], 5
    %67 = sst [smem:[%s66]] 8
    %69 = dma.general %s2, 1536, %s49, %s50, 131072, [#allocation8], 0, 0
    %s70 = scalar_lea.hbm %s4, 1152
    %s71 = scalar_lea.sflag [#allocation2], 3
    %s73 = sshll.u32 1, 14
    %s74 = sxor.u32 4294967295, %s73
    %78 = sst [smem:[#allocation10]] 512
    %s79 = scalar_lea.smem [#allocation10], 1
    %80 = sst [smem:[%s79]] 2048
    %s81 = scalar_lea.smem [#allocation10], 2
    %82 = sst [smem:[%s81]] 4
    %s83 = scalar_lea.smem [#allocation10], 3
    %84 = sst [smem:[%s83]] 128
    %s85 = scalar_lea.smem [#allocation10], 4
    %86 = sst [smem:[%s85]] 256
    %s87 = scalar_lea.smem [#allocation10], 5
    %88 = sst [smem:[%s87]] 8
    %90 = dma.general %s3, 1536, %s70, %s71, 131072, [#allocation10], 0, 0
    %s91 = smul.u32 8, 3
    %s92 = smul.u32 %s91, 4
    %s93 = smul.u32 %s92, 1
    %s94 = sshll.u32 %s93, 4
    %95 = dma.done [#allocation2], %s94
    %s96 = sshll.u32 %s93, 4
    %97 = dma.done %s29, %s96
    %s98 = sshll.u32 %s93, 4
    %99 = dma.done %s50, %s98
    %s100 = sshll.u32 %s93, 4
    %101 = dma.done %s71, %s100
  %102 = vsyncmov [#allocation2]
  %s103 = vpop.sfrf %102
  %p104 = scmp.eq.s32.totalorder %s103, 0
  %p105 = pneg %p104
  %107 = shalt.err (%p105)
  %s108 = scalar_lea.sflag [#allocation2], 1
  %109 = vsyncmov %s108
  %s110 = vpop.sfrf %109
  %p111 = scmp.eq.s32.totalorder %s110, 0
  %p112 = pneg %p111
  %114 = shalt.err (%p112)
  %s115 = scalar_lea.sflag [#allocation2], 2
  %116 = vsyncmov %s115
  %s117 = vpop.sfrf %116
  %p118 = scmp.eq.s32.totalorder %s117, 0
  %p119 = pneg %p118
  %121 = shalt.err (%p119)
  %s122 = scalar_lea.sflag [#allocation2], 3
  %123 = vsyncmov %s122
  %s124 = vpop.sfrf %123
  %p125 = scmp.eq.s32.totalorder %s124, 0
  %p126 = pneg %p125
  %128 = shalt.err (%p126)

</llo_original>
